<compile_context>
chip_gen: v7x
topology: tpu7x:2x2x1
jax: 0.10.0
libtpu: 0.0.40
codegen_flags: <defaults>
</compile_context>

<pallas_src>
import functools

import jax
import jax.numpy as jnp
from jax.experimental import pallas as pl
from jax.experimental.pallas import tpu as pltpu

_LANE = 128
_ACC_SUB = 8                      # accumulator sublane height (one f32 vreg row-tile)
_BLOCK_BYTES = 4 * 1024 * 1024    # per-input block byte budget (~4 MiB)


def _round_up(x, m):
    return ((x + m - 1) // m) * m


def _sublane_multiple(dtype):
    # (8,128) tiling for 4-byte dtypes; packed dtypes need taller sublane tiles.
    return {4: 8, 2: 16, 1: 32}.get(jnp.dtype(dtype).itemsize, 8)


def _num_tensorcores():
    """Best-effort TensorCores-per-chip (2 on v7x, 1 on v5e/v6e). Defaults to 1."""
    # TODO(synk): verify the TpuInfo field name for core count on v7x and that
    # the CORE_PARALLEL split actually lands on both TCs in xprof.
    probes = []
    try:
        probes.append(pltpu.get_tpu_info())
    except Exception:
        pass
    try:
        probes.append(jax.devices()[0])
    except Exception:
        pass
    for obj in probes:
        for attr in ("num_tensorcores", "tensorcores_per_chip", "num_cores",
                     "cores_per_chip", "core_count"):
            v = getattr(obj, attr, None)
            if isinstance(v, int) and v >= 1:
                return v
    return 1


def _dice_partial_kernel(x_ref, y_ref, part_ref, *, rows, tile_rows,
                         tiles_per_split, full_blocks, need_mask):
    """Accumulate per-split (3, 8, 128) partial sums of x*y, x*x, y*y.

    The output block is resident across the inner (reduction) grid axis; the
    8->1 sublane and 128->1 lane reductions happen in the wrapper epilogue.
    """
    c = pl.program_id(0)   # core-split index
    i = pl.program_id(1)   # row-tile index within the split ("arbitrary")

    @pl.when(i == 0)
    def _init():
        part_ref[...] = jnp.zeros_like(part_ref)

    def fold(p):
        # (tile_rows, 128) -> (8, 128): pure vreg-wise VPU adds, no XLU.
        return p.reshape(tile_rows // _ACC_SUB, _ACC_SUB, _LANE).sum(axis=0)

    def accumulate(xf, yf):
        # Single stacked read-modify-write of the resident accumulator block.
        part_ref[...] += jnp.stack([fold(xf * yf), fold(xf * xf), fold(yf * yf)])

    if not need_mask:
        accumulate(x_ref[...].astype(jnp.float32),
                   y_ref[...].astype(jnp.float32))
        return

    blk = c * tiles_per_split + i

    @pl.when(blk < full_blocks)
    def _interior():  # fully-valid tile: no mask work at all
        accumulate(x_ref[...].astype(jnp.float32),
                   y_ref[...].astype(jnp.float32))

    @pl.when(blk >= full_blocks)
    def _boundary():  # partial last tile and/or clamped overhang tile
        xf = x_ref[...].astype(jnp.float32)
        yf = y_ref[...].astype(jnp.float32)
        row_ids = blk * tile_rows + jax.lax.broadcasted_iota(
            jnp.int32, (tile_rows, _LANE), 0)
        valid = row_ids < rows
        accumulate(jnp.where(valid, xf, 0.0), jnp.where(valid, yf, 0.0))


def binary_dice(logits, targets, smooth=1e-05, p=2):
    """Pallas TPU implementation of BinaryDice.forward.

    Like the PyTorch reference, the forward pass hard-codes smooth=1e-5 and
    ignores self.p; the signature is kept for parity.
    """
    assert logits.shape[0] == targets.shape[0], (
        "logits & targets batch size don't match")
    del p                      # unused in the reference forward
    smooth = 1e-05             # reference forward overrides the ctor value

    x = jnp.asarray(logits)
    y = jnp.asarray(targets)
    # Keep native dtypes for the HBM stream (bf16/f32/int8 all fine); bools
    # become int8 (1 B/elem) and are upcast to f32 on the VPU in-kernel.
    if x.dtype == jnp.bool_:
        x = x.astype(jnp.int8)
    if y.dtype == jnp.bool_:
        y = y.astype(jnp.int8)

    x = x.reshape(-1)
    y = y.reshape(-1)
    n = x.shape[0]

    if n == 0:                 # (0 + smooth) / (0 + smooth)
        dice = jnp.float32(1.0)
        return dice, 1.0 - dice

    rows = n // _LANE
    rem = n - rows * _LANE

    def _tail_sums(xt, yt):
        xt = xt.astype(jnp.float32)
        yt = yt.astype(jnp.float32)
        return jnp.stack([jnp.sum(xt * yt), jnp.sum(xt * xt), jnp.sum(yt * yt)])

    if rows == 0:
        # Fewer than 128 elements: plain jnp is the right tool.
        sums = _tail_sums(x, y)
    else:
        x_main = x[:rows * _LANE] if rem else x
        y_main = y[:rows * _LANE] if rem else y
        x2 = x_main.reshape(rows, _LANE)    # pure re-view when lane-aligned
        y2 = y_main.reshape(rows, _LANE)

        itemsize = max(x2.dtype.itemsize, y2.dtype.itemsize)
        sub = max(_sublane_multiple(x2.dtype), _sublane_multiple(y2.dtype))
        # ~4 MiB per input block (8192 rows f32 / 16384 bf16 / 32768 int8).
        budget_rows = max(sub, (_BLOCK_BYTES // (_LANE * itemsize)) // sub * sub)
        tile_rows = min(budget_rows, _round_up(rows, sub))
        assert tile_rows % _ACC_SUB == 0

        total_tiles = pl.cdiv(rows, tile_rows)
        splits = max(1, min(_num_tensorcores(), total_tiles))
        tiles_per_split = pl.cdiv(total_tiles, splits)
        need_mask = (splits * tiles_per_split * tile_rows) != rows
        full_blocks = rows // tile_rows
        last_block = total_tiles - 1

        if splits > 1:
            dim_sems = (getattr(pltpu, "CORE_PARALLEL", "parallel"), "arbitrary")
        else:
            dim_sems = ("arbitrary", "arbitrary")

        def in_map(c, i):
            blk = c * tiles_per_split + i
            # Clamp so the DMA never targets a fully out-of-range block; the
            # in-kernel boundary mask zeroes any overhang contribution.
            return (jnp.minimum(blk, last_block), 0)

        kernel = functools.partial(
            _dice_partial_kernel, rows=rows, tile_rows=tile_rows,
            tiles_per_split=tiles_per_split, full_blocks=full_blocks,
            need_mask=need_mask)

        # TODO(synk): if an xprof on v7x shows exposed DMA at step boundaries,
        # add pipeline_mode=pl.Buffered(3) to the two input BlockSpecs.
        parts = pl.pallas_call(
            kernel,
            out_shape=jax.ShapeDtypeStruct(
                (splits * 3, _ACC_SUB, _LANE), jnp.float32),
            grid_spec=pltpu.PrefetchScalarGridSpec(
                num_scalar_prefetch=0,
                grid=(splits, tiles_per_split),
                in_specs=[
                    pl.BlockSpec((tile_rows, _LANE), in_map),
                    pl.BlockSpec((tile_rows, _LANE), in_map),
                ],
                out_specs=pl.BlockSpec((3, _ACC_SUB, _LANE),
                                       lambda c, i: (c, 0, 0)),
            ),
            compiler_params=pltpu.CompilerParams(
                dimension_semantics=dim_sems,
                vmem_limit_bytes=32 * 1024 * 1024),
            cost_estimate=pl.CostEstimate(
                flops=6 * rows * _LANE,
                transcendentals=0,
                bytes_accessed=rows * _LANE *
                (x2.dtype.itemsize + y2.dtype.itemsize)
                + splits * 3 * _ACC_SUB * _LANE * 4),
        )(x2, y2)

        # Tiny epilogue: combine splits x sublanes x lanes -> 3 scalars.
        sums = parts.reshape(splits, 3, _ACC_SUB, _LANE).sum(axis=(0, 2, 3))

        if rem:
            # <128-element ragged tail: sum in plain jnp, no full-array pad.
            sums = sums + _tail_sums(x[rows * _LANE:], y[rows * _LANE:])

    intersect, z_sum, y_sum = sums[0], sums[1], sums[2]
    dice = (2.0 * intersect + smooth) / (z_sum + y_sum + smooth)
    loss = 1.0 - dice
    return dice, loss


def _reference(logits, targets, smooth=1e-05):
    logits = jnp.asarray(logits, jnp.float32)
    targets = jnp.asarray(targets, jnp.float32)
    intersect = jnp.sum(logits * targets)
    y_sum = jnp.sum(targets * targets)
    z_sum = jnp.sum(logits * logits)
    dice = (2 * intersect + smooth) / (z_sum + y_sum + smooth)
    return dice, 1.0 - dice


if __name__ == "__main__":
    key = jax.random.PRNGKey(0)
    k1, k2 = jax.random.split(key)
    B, H, W = 2, 16, 16
    logits = jax.random.uniform(k1, (B, H, W), dtype=jnp.float32)
    targets = (jax.random.uniform(k2, (B, H, W)) > 0.5).astype(jnp.float32)

    dice, loss = binary_dice(logits, targets)
    dice = jax.block_until_ready(dice)
    loss = jax.block_until_ready(loss)

    ref_dice, ref_loss = _reference(logits, targets)
    assert jnp.allclose(dice, ref_dice, atol=1e-5, rtol=1e-5), (dice, ref_dice)
    assert jnp.allclose(loss, ref_loss, atol=1e-5, rtol=1e-5), (loss, ref_loss)

    print("KERNEL_OK")
</pallas_src>

<mosaic_0001>
module attributes {stable_mosaic.version = 11 : i64} {
  func.func @_dice_partial_kernel(%arg0: i32, %arg1: i32, %arg2: memref<8x128xf32, #tpu.memory_space<vmem>>, %arg3: memref<8x128xf32, #tpu.memory_space<vmem>>, %arg4: memref<3x8x128xf32, #tpu.memory_space<vmem>>) attributes {dimension_semantics = [#tpu.dimension_semantics<arbitrary>, #tpu.dimension_semantics<arbitrary>], iteration_bounds = array<i64: 1, 1>, scalar_prefetch = 0 : i64, scratch_operands = 0 : i64, tpu.core_type = #tpu.core_type<tc>, window_params = [{transform_indices = @transform_0, window_bounds = array<i64: 8, 128>}, {transform_indices = @transform_1, window_bounds = array<i64: 8, 128>}, {transform_indices = @transform_2, window_bounds = array<i64: 3, 8, 128>}]} {
    %c0_i32 = arith.constant 0 : i32
    %0 = arith.cmpi eq, %arg1, %c0_i32 : i32
    %1 = arith.extui %0 : i1 to i32
    %c0_i32_0 = arith.constant 0 : i32
    %2 = arith.cmpi ne, %1, %c0_i32_0 : i32
    scf.if %2 {
      %cst = arith.constant 0.000000e+00 : f32
      %11 = vector.broadcast %cst : f32 to vector<3x8x128xf32>
      %c0 = arith.constant 0 : index
      %c0_5 = arith.constant 0 : index
      %c0_6 = arith.constant 0 : index
      %12 = vector.load %arg4[%c0, %c0_5, %c0_6] : memref<3x8x128xf32, #tpu.memory_space<vmem>>, vector<3x8x128xf32>
      tpu.vector_store %arg4[%c0, %c0_5, %c0_6], %11 {strides = array<i32>} : memref<3x8x128xf32, #tpu.memory_space<vmem>>, vector<3x8x128xf32>,
    } else {
    }
    %c1_i32 = arith.constant 1 : i32
    %3 = arith.muli %arg0, %c1_i32 : i32
    %4 = arith.addi %3, %arg1 : i32
    %c0_i32_1 = arith.constant 0 : i32
    %5 = arith.cmpi slt, %4, %c0_i32_1 : i32
    %6 = arith.extui %5 : i1 to i32
    %c0_i32_2 = arith.constant 0 : i32
    %7 = arith.cmpi ne, %6, %c0_i32_2 : i32
    scf.if %7 {
      %c0 = arith.constant 0 : index
      %c0_5 = arith.constant 0 : index
      %11 = vector.load %arg2[%c0, %c0_5] : memref<8x128xf32, #tpu.memory_space<vmem>>, vector<8x128xf32>
      %c0_6 = arith.constant 0 : index
      %c0_7 = arith.constant 0 : index
      %12 = vector.load %arg3[%c0_6, %c0_7] : memref<8x128xf32, #tpu.memory_space<vmem>>, vector<8x128xf32>
      %c0_8 = arith.constant 0 : index
      %c0_9 = arith.constant 0 : index
      %c0_10 = arith.constant 0 : index
      %13 = vector.load %arg4[%c0_8, %c0_9, %c0_10] : memref<3x8x128xf32, #tpu.memory_space<vmem>>, vector<3x8x128xf32>
      %14 = arith.mulf %11, %12 : vector<8x128xf32>
      %15 = vector.shape_cast %14 : vector<8x128xf32> to vector<1x8x128xf32>
      %cst = arith.constant dense<0.000000e+00> : vector<8x128xf32>
      %16 = vector.multi_reduction <add>, %15, %cst [0] : vector<1x8x128xf32> to vector<8x128xf32>
      %17 = arith.mulf %11, %11 : vector<8x128xf32>
      %18 = vector.shape_cast %17 : vector<8x128xf32> to vector<1x8x128xf32>
      %cst_11 = arith.constant dense<0.000000e+00> : vector<8x128xf32>
      %19 = vector.multi_reduction <add>, %18, %cst_11 [0] : vector<1x8x128xf32> to vector<8x128xf32>
      %20 = arith.mulf %12, %12 : vector<8x128xf32>
      %21 = vector.shape_cast %20 : vector<8x128xf32> to vector<1x8x128xf32>
      %cst_12 = arith.constant dense<0.000000e+00> : vector<8x128xf32>
      %22 = vector.multi_reduction <add>, %21, %cst_12 [0] : vector<1x8x128xf32> to vector<8x128xf32>
      %23 = vector.shape_cast %16 : vector<8x128xf32> to vector<1x8x128xf32>
      %24 = vector.shape_cast %19 : vector<8x128xf32> to vector<1x8x128xf32>
      %25 = vector.shape_cast %22 : vector<8x128xf32> to vector<1x8x128xf32>
      %26 = tpu.concatenate %23, %24, %25 in 0 : vector<1x8x128xf32>, vector<1x8x128xf32>, vector<1x8x128xf32> -> vector<3x8x128xf32>
      %27 = arith.addf %13, %26 : vector<3x8x128xf32>
      %c0_13 = arith.constant 0 : index
      %c0_14 = arith.constant 0 : index
      %c0_15 = arith.constant 0 : index
      %28 = vector.load %arg4[%c0_13, %c0_14, %c0_15] : memref<3x8x128xf32, #tpu.memory_space<vmem>>, vector<3x8x128xf32>
      tpu.vector_store %arg4[%c0_13, %c0_14, %c0_15], %27 {strides = array<i32>} : memref<3x8x128xf32, #tpu.memory_space<vmem>>, vector<3x8x128xf32>,
    } else {
    }
    %c0_i32_3 = arith.constant 0 : i32
    %8 = arith.cmpi sge, %4, %c0_i32_3 : i32
    %9 = arith.extui %8 : i1 to i32
    %c0_i32_4 = arith.constant 0 : i32
    %10 = arith.cmpi ne, %9, %c0_i32_4 : i32
    scf.if %10 {
      %c0 = arith.constant 0 : index
      %c0_5 = arith.constant 0 : index
      %11 = vector.load %arg2[%c0, %c0_5] : memref<8x128xf32, #tpu.memory_space<vmem>>, vector<8x128xf32>
      %c0_6 = arith.constant 0 : index
      %c0_7 = arith.constant 0 : index
      %12 = vector.load %arg3[%c0_6, %c0_7] : memref<8x128xf32, #tpu.memory_space<vmem>>, vector<8x128xf32>
      %c8_i32 = arith.constant 8 : i32
      %13 = arith.muli %4, %c8_i32 : i32
      %14 = tpu.iota {dimensions = array<i32: 0>} : vector<8x128xi32>
      %15 = vector.broadcast %13 : i32 to vector<8x128xi32>
      %16 = arith.addi %15, %14 : vector<8x128xi32>
      %c4_i32 = arith.constant 4 : i32
      %17 = vector.broadcast %c4_i32 : i32 to vector<8x128xi32>
      %18 = arith.cmpi slt, %16, %17 : vector<8x128xi32>
      %cst = arith.constant 0.000000e+00 : f32
      %19 = vector.broadcast %cst : f32 to vector<8x128xf32>
      %20 = arith.select %18, %11, %19 : vector<8x128xi1>, vector<8x128xf32>
      %cst_8 = arith.constant 0.000000e+00 : f32
      %21 = vector.broadcast %cst_8 : f32 to vector<8x128xf32>
      %22 = arith.select %18, %12, %21 : vector<8x128xi1>, vector<8x128xf32>
      %c0_9 = arith.constant 0 : index
      %c0_10 = arith.constant 0 : index
      %c0_11 = arith.constant 0 : index
      %23 = vector.load %arg4[%c0_9, %c0_10, %c0_11] : memref<3x8x128xf32, #tpu.memory_space<vmem>>, vector<3x8x128xf32>
      %24 = arith.mulf %20, %22 : vector<8x128xf32>
      %25 = vector.shape_cast %24 : vector<8x128xf32> to vector<1x8x128xf32>
      %cst_12 = arith.constant dense<0.000000e+00> : vector<8x128xf32>
      %26 = vector.multi_reduction <add>, %25, %cst_12 [0] : vector<1x8x128xf32> to vector<8x128xf32>
      %27 = arith.mulf %20, %20 : vector<8x128xf32>
      %28 = vector.shape_cast %27 : vector<8x128xf32> to vector<1x8x128xf32>
      %cst_13 = arith.constant dense<0.000000e+00> : vector<8x128xf32>
      %29 = vector.multi_reduction <add>, %28, %cst_13 [0] : vector<1x8x128xf32> to vector<8x128xf32>
      %30 = arith.mulf %22, %22 : vector<8x128xf32>
      %31 = vector.shape_cast %30 : vector<8x128xf32> to vector<1x8x128xf32>
      %cst_14 = arith.constant dense<0.000000e+00> : vector<8x128xf32>
      %32 = vector.multi_reduction <add>, %31, %cst_14 [0] : vector<1x8x128xf32> to vector<8x128xf32>
      %33 = vector.shape_cast %26 : vector<8x128xf32> to vector<1x8x128xf32>
      %34 = vector.shape_cast %29 : vector<8x128xf32> to vector<1x8x128xf32>
      %35 = vector.shape_cast %32 : vector<8x128xf32> to vector<1x8x128xf32>
      %36 = tpu.concatenate %33, %34, %35 in 0 : vector<1x8x128xf32>, vector<1x8x128xf32>, vector<1x8x128xf32> -> vector<3x8x128xf32>
      %37 = arith.addf %23, %36 : vector<3x8x128xf32>
      %c0_15 = arith.constant 0 : index
      %c0_16 = arith.constant 0 : index
      %c0_17 = arith.constant 0 : index
      %38 = vector.load %arg4[%c0_15, %c0_16, %c0_17] : memref<3x8x128xf32, #tpu.memory_space<vmem>>, vector<3x8x128xf32>
      tpu.vector_store %arg4[%c0_15, %c0_16, %c0_17], %37 {strides = array<i32>} : memref<3x8x128xf32, #tpu.memory_space<vmem>>, vector<3x8x128xf32>,
    } else {
    }
    return
  }
  func.func @transform_0(%arg0: i32, %arg1: i32) -> (i32, i32) {
    %c1_i32 = arith.constant 1 : i32
    %0 = arith.muli %arg0, %c1_i32 : i32
    %1 = arith.addi %0, %arg1 : i32
    %c0_i32 = arith.constant 0 : i32
    %2 = arith.minsi %1, %c0_i32 : i32
    %c0_i32_0 = arith.constant 0 : i32
    %c0_i32_1 = arith.constant 0 : i32
    return %2, %c0_i32_0 : i32, i32
  }
  func.func @transform_1(%arg0: i32, %arg1: i32) -> (i32, i32) {
    %c1_i32 = arith.constant 1 : i32
    %0 = arith.muli %arg0, %c1_i32 : i32
    %1 = arith.addi %0, %arg1 : i32
    %c0_i32 = arith.constant 0 : i32
    %2 = arith.minsi %1, %c0_i32 : i32
    %c0_i32_0 = arith.constant 0 : i32
    %c0_i32_1 = arith.constant 0 : i32
    return %2, %c0_i32_0 : i32, i32
  }
  func.func @transform_2(%arg0: i32, %arg1: i32) -> (i32, i32, i32) {
    %c0_i32 = arith.constant 0 : i32
    %c0_i32_0 = arith.constant 0 : i32
    %c0_i32_1 = arith.constant 0 : i32
    return %arg0, %c0_i32, %c0_i32_0 : i32, i32, i32
  }
}

</mosaic_0001>

<llo_original>
// kernel: tpu_custom_call.1
$region0: #{tpu_custom_call.1}
  #allocation0 [shape = 'u32[]', space=smem, size = 0x4, offset = 0x4, fixed_abs, tag = 'smem constant byte address 0x4 - core index']
  #allocation1 [shape = 'u32[144,128]{1,0:T(1,128)}', space=vmem, size = 0x12000, scoped, tag = 'internal scratch']
  %s0 = inlined_call_operand.hbm [shape: f32[4,128], index: 0, kind: input, shape index: {}]
  %s1 = inlined_call_operand.hbm [shape: f32[4,128], index: 1, kind: input, shape index: {}]
  %s2 = inlined_call_operand.hbm [shape: f32[3,8,128], index: 2, kind: output, shape index: {}]
  %s3 = sld [smem:[#allocation0]]
  $region38: #{tpu_custom_call.1} parent=0
    _
  %s5 = ssub.s32 1, %s3
  %s6 = scalar_select 0, %s5, %s3
  $region1: #{tpu_custom_call.1} parent=0
    #allocation2 [shape = 'u8[4096]{0}', space=vmem, size = 0x1000, scoped, tag = 'input window, operand 0, single buffered']
    #allocation3 [shape = 's32[1]{0}', space=sflag, size = 0x4, scoped, tag = 'scoped memory for tpu_custom_call.1']
    #allocation4 [shape = 's32[1]{0}', space=sflag, size = 0x4, scoped, tag = 'scoped memory for tpu_custom_call.1']
    #allocation5 [shape = 'u8[4096]{0}', space=vmem, size = 0x1000, scoped, tag = 'input window, operand 1, single buffered']
    #allocation6 [shape = 's32[1]{0}', space=sflag, size = 0x4, scoped, tag = 'scoped memory for tpu_custom_call.1']
    #allocation7 [shape = 'u8[12288]{0}', space=vmem, size = 0x3000, scoped, tag = 'output window, operand 0, single buffered']
    %7 = vsyncpa [#allocation3], 0
    %8 = vsyncpa [#allocation6], 0
    %9 = vsyncpa [#allocation4], 0
    // Predicated region
    $region2: #{tpu_custom_call.1} parent=1 // pred_check
      _
    $region3: #{tpu_custom_call.1} parent=1 // pred_check_branch
      %11 = sbr.rel (0) target = $region5
    $region4: #{tpu_custom_call.1} parent=1 // pred_region
      %s12 = sadd.s32 0, 0
      %p13 = scmp.lt.s32.totalorder %s12, 0
      %s14 = scalar_select %p13, %s12, 0
      %s15 = smul.u32 2, %s14
      %s16 = ssub.s32 1, %s15
      %s17 = smul.u32 64, %s16
      %s19 = ssub.s32 128, %s17
      %20 = vsyncadd [#allocation3], %s19
      %p21 = scmp.ne.s32.totalorder 0, %s17
      %s22 = smul.addr %s15, 64
      %s23 = scalar_lea.hbm %s0, %s22
      %s24 = smul.u32 4, %s16
      %s25 = sshll.u32 [#allocation2], 4
      %s26 = int_to_ptr.vmem [resolvable:$true] %s25
      %s27 = sshll.u32 %s24, 4
      %31 = dma.hbm_to_vmem [thread:$0]  (%p21), %s23, %s27, %s26, [#allocation3], 64, 64, 4
    $region5: #{tpu_custom_call.1} parent=1 // pred_fallthru
      _
    // Predicated region
    $region6: #{tpu_custom_call.1} parent=1 // pred_check
      _
    $region7: #{tpu_custom_call.1} parent=1 // pred_check_branch
      %33 = sbr.rel (0) target = $region9
    $region8: #{tpu_custom_call.1} parent=1 // pred_region
      %s34 = sadd.s32 0, 0
      %p35 = scmp.lt.s32.totalorder %s34, 0
      %s36 = scalar_select %p35, %s34, 0
      %s37 = smul.u32 2, %s36
      %s38 = ssub.s32 1, %s37
      %s39 = smul.u32 64, %s38
      %s41 = ssub.s32 128, %s39
      %42 = vsyncadd [#allocation6], %s41
      %p43 = scmp.ne.s32.totalorder 0, %s39
      %s44 = smul.addr %s37, 64
      %s45 = scalar_lea.hbm %s1, %s44
      %s46 = smul.u32 4, %s38
      %s47 = sshll.u32 [#allocation5], 4
      %s48 = int_to_ptr.vmem [resolvable:$true] %s47
      %s49 = sshll.u32 %s46, 4
      %53 = dma.hbm_to_vmem [thread:$0]  (%p43), %s45, %s49, %s48, [#allocation6], 64, 64, 4
    $region9: #{tpu_custom_call.1} parent=1 // pred_fallthru
      _
    // Predicated region
    $region10: #{tpu_custom_call.1} parent=1 // pred_check
      _
    $region11: #{tpu_custom_call.1} parent=1 // pred_check_branch
      %55 = sbr.rel (0) target = $region13
    $region12: #{tpu_custom_call.1} parent=1 // pred_region
      %56 = dma.done [#allocation3], 128
    $region13: #{tpu_custom_call.1} parent=1 // pred_fallthru
      _
    // Predicated region
    $region14: #{tpu_custom_call.1} parent=1 // pred_check
      _
    $region15: #{tpu_custom_call.1} parent=1 // pred_check_branch
      %58 = sbr.rel (0) target = $region17
    $region16: #{tpu_custom_call.1} parent=1 // pred_region
      %59 = dma.done [#allocation6], 128
    $region17: #{tpu_custom_call.1} parent=1 // pred_fallthru
      _
    %s60 = sadd.s32 0, 0
    %p61 = scmp.lt.s32.totalorder %s60, 0
    %s62 = scalar_select %p61, %s60, 0
    %s63 = smul.u32 2, %s62
    %s64 = ssub.s32 1, %s63
    %s65 = smul.u32 64, %s64
    %s66 = sadd.s32 0, 0
    %p67 = scmp.lt.s32.totalorder %s66, 0
    %s68 = scalar_select %p67, %s66, 0
    %s69 = smul.u32 2, %s68
    %s70 = ssub.s32 1, %s69
    %s71 = smul.u32 64, %s70
    %p72 = scmp.eq.s32.totalorder 0, 0
    // Predicated region
    $region18: #{tpu_custom_call.1} parent=1 // pred_check
      %p73 = pneg %p72
    $region19: #{tpu_custom_call.1} parent=1 // pred_check_branch
      %75 = sbr.rel (%p73) target = $region21
    $region20: #{tpu_custom_call.1} parent=1 // pred_region
      %76 = vst [vmem:[#allocation7] sm:$0xff] 0.0
      %77 = vst [vmem:[#allocation7 + $0x8] sm:$0xff] 0.0
      %78 = vst [vmem:[#allocation7 + $0x10] sm:$0xff] 0.0
    $region21: #{tpu_custom_call.1} parent=1 // pred_fallthru
      _
    %s79 = sadd.s32 0, 0
    %p80 = scmp.lt.s32.totalorder %s79, 0
    // Predicated region
    $region22: #{tpu_custom_call.1} parent=1 // pred_check
      %p81 = pneg %p80
    $region23: #{tpu_custom_call.1} parent=1 // pred_check_branch
      %83 = sbr.rel (%p81) target = $region25
    $region24: #{tpu_custom_call.1} parent=1 // pred_region
      %v84 = vld [vmem:[#allocation2] sm:$0xff]
      %v85 = vld [vmem:[#allocation5] sm:$0xff]
      %v86 = vld [vmem:[#allocation7] sm:$0xff]
      %v87 = vld [vmem:[#allocation7 + $0x8] sm:$0xff]
      %v88 = vld [vmem:[#allocation7 + $0x10] sm:$0xff]
      %v89 = vmul.f32 %v84, %v85
      %v90 = vadd.f32 %v89, 0.0
      %v91 = vmul.f32 %v84, %v84
      %v92 = vadd.f32 %v91, 0.0
      %v93 = vmul.f32 %v85, %v85
      %v94 = vadd.f32 %v93, 0.0
      %v95 = vadd.f32 %v86, %v90
      %v96 = vadd.f32 %v87, %v92
      %v97 = vadd.f32 %v88, %v94
      %98 = vst [vmem:[#allocation7] sm:$0xff] %v95
      %99 = vst [vmem:[#allocation7 + $0x8] sm:$0xff] %v96
      %100 = vst [vmem:[#allocation7 + $0x10] sm:$0xff] %v97
    $region25: #{tpu_custom_call.1} parent=1 // pred_fallthru
      _
    %p101 = scmp.ge.s32.totalorder %s79, 0
    // Predicated region
    $region26: #{tpu_custom_call.1} parent=1 // pred_check
      %p102 = pneg %p101
    $region27: #{tpu_custom_call.1} parent=1 // pred_check_branch
      %104 = sbr.rel (%p102) target = $region29
    $region28: #{tpu_custom_call.1} parent=1 // pred_region
      %v105 = vld [vmem:[#allocation2] sm:$0xff]
      %v106 = vld [vmem:[#allocation5] sm:$0xff]
      %s107 = smul.u32 %s79, 8
      %v108 = vlaneseq
      %v109 = vshrl.u32 %v108, 7
      %v110 = vstv %s107
      %v111 = vadd.s32 %v110, %v109
      %vm112 = vcmp.lt.s32.totalorder %v111, 4
      %v113 = vsel %vm112, %v105, 0.0
      %v114 = vsel %vm112, %v106, 0.0
      %v115 = vld [vmem:[#allocation7] sm:$0xff]
      %v116 = vld [vmem:[#allocation7 + $0x8] sm:$0xff]
      %v117 = vld [vmem:[#allocation7 + $0x10] sm:$0xff]
      %v118 = vmul.f32 %v113, %v114
      %v119 = vadd.f32 %v118, 0.0
      %v120 = vmul.f32 %v113, %v113
      %v121 = vadd.f32 %v120, 0.0
      %v122 = vmul.f32 %v114, %v114
      %v123 = vadd.f32 %v122, 0.0
      %v124 = vadd.f32 %v115, %v119
      %v125 = vadd.f32 %v116, %v121
      %v126 = vadd.f32 %v117, %v123
      %127 = vst [vmem:[#allocation7] sm:$0xff] %v124
      %128 = vst [vmem:[#allocation7 + $0x8] sm:$0xff] %v125
      %129 = vst [vmem:[#allocation7 + $0x10] sm:$0xff] %v126
    $region29: #{tpu_custom_call.1} parent=1 // pred_fallthru
      _
    // Predicated region
    $region30: #{tpu_custom_call.1} parent=1 // pred_check
      _
    $region31: #{tpu_custom_call.1} parent=1 // pred_check_branch
      %131 = sbr.rel (0) target = $region33
    $region32: #{tpu_custom_call.1} parent=1 // pred_region
      %s133 = ssub.s32 384, 384
      %134 = vsyncadd [#allocation4], %s133
      %s135 = sshll.u32 [#allocation7], 4
      %s136 = int_to_ptr.vmem [resolvable:$true] %s135
      %141 = dma.vmem_to_hbm [thread:$0]  %s136, 384, %s2, [#allocation4], 128, 128, 8
    $region33: #{tpu_custom_call.1} parent=1 // pred_fallthru
      _
    // Predicated region
    $region34: #{tpu_custom_call.1} parent=1 // pred_check
      _
    $region35: #{tpu_custom_call.1} parent=1 // pred_check_branch
      %143 = sbr.rel (0) target = $region37
    $region36: #{tpu_custom_call.1} parent=1 // pred_region
      %144 = dma.done [#allocation4], 384
    $region37: #{tpu_custom_call.1} parent=1 // pred_fallthru
      _
    %145 = vsyncpa [#allocation3], 1
    %146 = vsyncpa [#allocation6], 1
    %147 = vsyncpa [#allocation4], 1

</llo_original>
